<compile_context>
chip_gen: v6e
topology: v6e:2x2x1
jax: 0.10.0
libtpu: 0.0.40
codegen_flags: <defaults>
</compile_context>

<pallas_src>
import functools

import numpy as np
import jax
import jax.numpy as jnp
from jax import lax
from jax.experimental import pallas as pl
from jax.experimental.pallas import tpu as pltpu

ALPHA = 0.5
N_NODES = 24
F_IN = 16
C_OUT = 32
N_EDGES = 48

_VMEM = pl.BlockSpec(memory_space=pltpu.MemorySpace.VMEM)


# ------------------------------ fused Pallas kernel ------------------------------

def _dir_gcn_kernel(x_ref, adj_ref, w_ref, b_ref, o_ref, *, out_dim):
    adj = adj_ref[...]                                              # [N, N] dense edge counts

    # directed_norm: D_out^{-1/2} A D_in^{-1/2}, zero-degree rows/cols -> 0
    deg_out = jnp.sum(adj, axis=1, keepdims=True)                   # [N, 1] row sums
    deg_in = jnp.sum(adj, axis=0, keepdims=True)                    # [1, N] col sums
    inv_out = jnp.where(deg_out > 0.0, lax.rsqrt(deg_out), 0.0)     # EUP rsqrt
    inv_in = jnp.where(deg_in > 0.0, lax.rsqrt(deg_in), 0.0)
    adj_norm = adj * inv_out * inv_in                               # [N, N]

    # Single fused projection with the pre-scaled, concatenated weight [F, 2C]:
    #   xp[:, :C]  = x @ (alpha     * W_s2d)
    #   xp[:, C:]  = x @ ((1-alpha) * W_d2s)
    xp = jnp.dot(x_ref[...], w_ref[...], preferred_element_type=jnp.float32)   # [N, 2C]
    xp1 = xp[:, :out_dim]
    xp2 = xp[:, out_dim:]

    # adj_norm @ xp1  and  adj_norm^T @ xp2 (transposed-LHS contraction, no explicit transpose).
    m1 = jnp.dot(adj_norm, xp1, preferred_element_type=jnp.float32)             # [N, C]
    m2 = lax.dot_general(adj_norm, xp2,
                         dimension_numbers=(((0,), (0,)), ((), ())),
                         preferred_element_type=jnp.float32)                    # [N, C]

    # Alpha mix is already folded into the weights; bias is pre-mixed on the host.
    o_ref[...] = m1 + m2 + b_ref[...]


def dir_gcn_conv(x, adj, w_s2d, b_s2d, w_d2s, b_d2s, *, alpha=ALPHA):
    n = x.shape[0]
    c = w_s2d.shape[1]
    # One-time parameter prep (host side): fold alpha into the concatenated weight and premix
    # the biases, so the kernel epilogue is a single broadcast add.
    w_cat = jnp.concatenate([alpha * w_s2d, (1.0 - alpha) * w_d2s], axis=1)     # [F, 2C]
    b_mix = (alpha * b_s2d + (1.0 - alpha) * b_d2s).reshape(1, c)               # [1, C]
    return pl.pallas_call(
        functools.partial(_dir_gcn_kernel, out_dim=c),
        out_shape=jax.ShapeDtypeStruct((n, c), jnp.float32),
        in_specs=[_VMEM] * 4,
        out_specs=_VMEM,
    )(x, adj, w_cat, b_mix)


# --------------------------- pure-JAX reference ------------------------------

def _directed_norm_ref(a):
    in_deg = a.sum(axis=0)
    out_deg = a.sum(axis=1)
    in_inv = jnp.where(in_deg > 0.0, in_deg ** -0.5, 0.0)
    out_inv = jnp.where(out_deg > 0.0, out_deg ** -0.5, 0.0)
    return a * out_inv[:, None] * in_inv[None, :]


def forward_ref(x, adj, w_s2d, b_s2d, w_d2s, b_d2s, *, alpha=ALPHA):
    adj_norm = _directed_norm_ref(adj)
    adj_t_norm = _directed_norm_ref(adj.T)
    out_s2d = (adj_norm @ x) @ w_s2d + b_s2d
    out_d2s = (adj_t_norm @ x) @ w_d2s + b_d2s
    return alpha * out_s2d + (1.0 - alpha) * out_d2s


# ------------------------------------ main -----------------------------------

if __name__ == "__main__":
    key = jax.random.PRNGKey(0)
    kx, ks, kd, k1, k2, k3, k4 = jax.random.split(key, 7)

    x = jax.random.normal(kx, (N_NODES, F_IN), jnp.float32)

    # synthetic edge_index; dense adjacency counts duplicate edges (matches SparseTensor spmm)
    src = jax.random.randint(ks, (N_EDGES,), 0, N_NODES)
    dst = jax.random.randint(kd, (N_EDGES,), 0, N_NODES)
    adj = jnp.zeros((N_NODES, N_NODES), jnp.float32).at[src, dst].add(1.0)

    w_s2d = (0.1 * jax.random.normal(k1, (F_IN, C_OUT))).astype(jnp.float32)
    b_s2d = (0.1 * jax.random.normal(k2, (C_OUT,))).astype(jnp.float32)
    w_d2s = (0.1 * jax.random.normal(k3, (F_IN, C_OUT))).astype(jnp.float32)
    b_d2s = (0.1 * jax.random.normal(k4, (C_OUT,))).astype(jnp.float32)

    fwd = jax.jit(functools.partial(dir_gcn_conv, alpha=ALPHA))
    out = fwd(x, adj, w_s2d, b_s2d, w_d2s, b_d2s)
    out = jax.block_until_ready(out)

    ref = forward_ref(x, adj, w_s2d, b_s2d, w_d2s, b_d2s, alpha=ALPHA)
    np.testing.assert_allclose(np.asarray(out), np.asarray(ref), rtol=2e-2, atol=2e-2)

    print("KERNEL_OK")
</pallas_src>

<mosaic_0001>
module attributes {stable_mosaic.version = 11 : i64} {
  func.func @_dir_gcn_kernel(%arg0: memref<24x16xf32, #tpu.memory_space<vmem>>, %arg1: memref<24x24xf32, #tpu.memory_space<vmem>>, %arg2: memref<16x64xf32, #tpu.memory_space<vmem>>, %arg3: memref<1x32xf32, #tpu.memory_space<vmem>>, %arg4: memref<24x32xf32, #tpu.memory_space<vmem>>) attributes {dimension_semantics = [], scalar_prefetch = 0 : i64, scratch_operands = 0 : i64, tpu.core_type = #tpu.core_type<tc>} {
    %c0 = arith.constant 0 : index
    %c0_0 = arith.constant 0 : index
    %0 = vector.load %arg1[%c0, %c0_0] : memref<24x24xf32, #tpu.memory_space<vmem>>, vector<24x24xf32>
    %cst = arith.constant dense<0.000000e+00> : vector<24xf32>
    %1 = vector.multi_reduction <add>, %0, %cst [1] : vector<24x24xf32> to vector<24xf32>
    %2 = vector.shape_cast %1 : vector<24xf32> to vector<24x1xf32>
    %cst_1 = arith.constant dense<0.000000e+00> : vector<24xf32>
    %3 = vector.multi_reduction <add>, %0, %cst_1 [0] : vector<24x24xf32> to vector<24xf32>
    %4 = vector.shape_cast %3 : vector<24xf32> to vector<1x24xf32>
    %cst_2 = arith.constant 0.000000e+00 : f32
    %5 = vector.broadcast %cst_2 : f32 to vector<24x1xf32>
    %6 = arith.cmpf ogt, %2, %5 : vector<24x1xf32>
    %7 = math.rsqrt %2 : vector<24x1xf32>
    %cst_3 = arith.constant 0.000000e+00 : f32
    %8 = vector.broadcast %cst_3 : f32 to vector<24x1xf32>
    %9 = arith.select %6, %7, %8 : vector<24x1xi1>, vector<24x1xf32>
    %cst_4 = arith.constant 0.000000e+00 : f32
    %10 = vector.broadcast %cst_4 : f32 to vector<1x24xf32>
    %11 = arith.cmpf ogt, %4, %10 : vector<1x24xf32>
    %12 = math.rsqrt %4 : vector<1x24xf32>
    %cst_5 = arith.constant 0.000000e+00 : f32
    %13 = vector.broadcast %cst_5 : f32 to vector<1x24xf32>
    %14 = arith.select %11, %12, %13 : vector<1x24xi1>, vector<1x24xf32>
    %15 = vector.broadcast %9 : vector<24x1xf32> to vector<24x24xf32>
    %16 = arith.mulf %0, %15 : vector<24x24xf32>
    %17 = vector.broadcast %14 : vector<1x24xf32> to vector<24x24xf32>
    %18 = arith.mulf %16, %17 : vector<24x24xf32>
    %c0_6 = arith.constant 0 : index
    %c0_7 = arith.constant 0 : index
    %19 = vector.load %arg0[%c0_6, %c0_7] : memref<24x16xf32, #tpu.memory_space<vmem>>, vector<24x16xf32>
    %c0_8 = arith.constant 0 : index
    %c0_9 = arith.constant 0 : index
    %20 = vector.load %arg2[%c0_8, %c0_9] : memref<16x64xf32, #tpu.memory_space<vmem>>, vector<16x64xf32>
    %cst_10 = arith.constant dense<0.000000e+00> : vector<24x64xf32>
    %21 = tpu.matmul %19, %20, %cst_10 {dimension_numbers = #tpu.dot_dimension_numbers<[1], [0], [0], [1], [0, 0, 1, 1], [], []>} : vector<24x16xf32>, vector<16x64xf32>, vector<24x64xf32> -> vector<24x64xf32>
    %22 = vector.extract_strided_slice %21 {offsets = [0, 0], sizes = [24, 32], strides = [1, 1]} : vector<24x64xf32> to vector<24x32xf32>
    %23 = vector.extract_strided_slice %21 {offsets = [0, 32], sizes = [24, 32], strides = [1, 1]} : vector<24x64xf32> to vector<24x32xf32>
    %cst_11 = arith.constant dense<0.000000e+00> : vector<24x32xf32>
    %24 = tpu.matmul %18, %22, %cst_11 {dimension_numbers = #tpu.dot_dimension_numbers<[1], [0], [0], [1], [0, 0, 1, 1], [], []>} : vector<24x24xf32>, vector<24x32xf32>, vector<24x32xf32> -> vector<24x32xf32>
    %cst_12 = arith.constant dense<0.000000e+00> : vector<24x32xf32>
    %25 = tpu.matmul %18, %23, %cst_12 {dimension_numbers = #tpu.dot_dimension_numbers<[0], [0], [1], [1], [0, 1, 1, 1], [], []>} : vector<24x24xf32>, vector<24x32xf32>, vector<24x32xf32> -> vector<24x32xf32>
    %26 = arith.addf %24, %25 : vector<24x32xf32>
    %c0_13 = arith.constant 0 : index
    %c0_14 = arith.constant 0 : index
    %27 = vector.load %arg3[%c0_13, %c0_14] : memref<1x32xf32, #tpu.memory_space<vmem>>, vector<1x32xf32>
    %28 = vector.broadcast %27 : vector<1x32xf32> to vector<24x32xf32>
    %29 = arith.addf %26, %28 : vector<24x32xf32>
    %c0_15 = arith.constant 0 : index
    %c0_16 = arith.constant 0 : index
    %30 = vector.load %arg4[%c0_15, %c0_16] : memref<24x32xf32, #tpu.memory_space<vmem>>, vector<24x32xf32>
    tpu.vector_store %arg4[%c0_15, %c0_16], %29 {strides = array<i32>} : memref<24x32xf32, #tpu.memory_space<vmem>>, vector<24x32xf32>,
    return
  }
}

</mosaic_0001>

<llo_original>
// kernel: dir_gcn_conv.1
$region0: #{dir_gcn_conv.1}
  #allocation0 [shape = 'u32[]', space=smem, size = 0x4, offset = 0x4, fixed_abs, tag = 'smem constant byte address 0x4 - core index']
  #allocation1 [shape = 'u32[144,128]{1,0:T(1,128)}', space=vmem, size = 0x12000, scoped, tag = 'internal scratch']
  %s0 = inlined_call_operand.vmem [shape: f32[24,16], index: 0, kind: input, shape index: {}]
  %s1 = inlined_call_operand.vmem [shape: f32[24,24], index: 1, kind: input, shape index: {}]
  %s2 = inlined_call_operand.vmem [shape: f32[16,64], index: 2, kind: input, shape index: {}]
  %s3 = inlined_call_operand.vmem [shape: f32[1,32], index: 3, kind: input, shape index: {}]
  %s4 = inlined_call_operand.hbm [shape: f32[24,32], index: 4, kind: output, shape index: {}]
  %s5 = sld [smem:[#allocation0]]
  $region26: #{dir_gcn_conv.1} parent=0
    _
  %s7 = ssub.s32 1, %s5
  %s8 = scalar_select 0, %s7, %s5
  $region1: #{dir_gcn_conv.1} parent=0
    #allocation2 [shape = 'u8[12288]{0}', space=vmem, size = 0x3000, scoped, tag = 'output window, operand 0, single buffered']
    #allocation3 [shape = 's32[1]{0}', space=sflag, size = 0x4, scoped, tag = 'scoped memory for dir_gcn_conv.1']
    %9 = vsyncpa [#allocation3], 0
    // Predicated region
    $region2: #{dir_gcn_conv.1} parent=1 // pred_check
      _
    $region3: #{dir_gcn_conv.1} parent=1 // pred_check_branch
      %11 = sbr.rel (0) target = $region5
    $region4: #{dir_gcn_conv.1} parent=1 // pred_region
      _
    $region5: #{dir_gcn_conv.1} parent=1 // pred_fallthru
      _
    // Predicated region
    $region6: #{dir_gcn_conv.1} parent=1 // pred_check
      _
    $region7: #{dir_gcn_conv.1} parent=1 // pred_check_branch
      %13 = sbr.rel (0) target = $region9
    $region8: #{dir_gcn_conv.1} parent=1 // pred_region
      _
    $region9: #{dir_gcn_conv.1} parent=1 // pred_fallthru
      _
    // Predicated region
    $region10: #{dir_gcn_conv.1} parent=1 // pred_check
      _
    $region11: #{dir_gcn_conv.1} parent=1 // pred_check_branch
      %15 = sbr.rel (0) target = $region13
    $region12: #{dir_gcn_conv.1} parent=1 // pred_region
      _
    $region13: #{dir_gcn_conv.1} parent=1 // pred_fallthru
      _
    // Predicated region
    $region14: #{dir_gcn_conv.1} parent=1 // pred_check
      _
    $region15: #{dir_gcn_conv.1} parent=1 // pred_check_branch
      %17 = sbr.rel (0) target = $region17
    $region16: #{dir_gcn_conv.1} parent=1 // pred_region
      _
    $region17: #{dir_gcn_conv.1} parent=1 // pred_fallthru
      _
    %v18 = vld [vmem:[%s1] sm:$0xff]
    %v19 = vld [vmem:[%s1 + $0x8] sm:$0xff]
    %v20 = vld [vmem:[%s1 + $0x10] sm:$0xff]
    %vm21 = vcmask 195584
    %v22 = vsel %vm21, %v18, 0.0
    %23 = vadd.xlane.f32.xlu0 %v22
    %v24 = vpop.xlane.xlu0 %23
    %v25 = vsel %vm21, %v19, 0.0
    %26 = vadd.xlane.f32.xlu0 %v25
    %v27 = vpop.xlane.xlu0 %26
    %v28 = vsel %vm21, %v20, 0.0
    %29 = vadd.xlane.f32.xlu0 %v28
    %v30 = vpop.xlane.xlu0 %29
    %v31 = vadd.f32 %v22, %v25
    %v32 = vadd.f32 %v31, %v28
    %v33 = vrot.slane %v32, 4
    %v34 = vadd.f32 %v32, %v33
    %v35 = vrot.slane %v34, 2
    %v36 = vadd.f32 %v34, %v35
    %v37 = vrot.slane %v36, 1
    %v38 = vadd.f32 %v36, %v37
    %vm39 = vcmp.gt.f32.partialorder %v24, 0.0
    %vm40 = vcmp.gt.f32.partialorder %v27, 0.0
    %vm41 = vcmp.gt.f32.partialorder %v30, 0.0
    %v42 = vrsqrt.pop %v24
    %v43 = vrsqrt.pop %v27
    %v44 = vrsqrt.pop %v30
    %v45 = vsel %vm39, %v42, 0.0
    %v46 = vsel %vm40, %v43, 0.0
    %v47 = vsel %vm41, %v44, 0.0
    %vm48 = vcmp.gt.f32.partialorder %v38, 0.0
    %v49 = vrsqrt.pop %v38
    %v50 = vsel %vm48, %v49, 0.0
    %v51 = vmul.f32 %v18, %v45
    %v52 = vmul.f32 %v19, %v46
    %v53 = vmul.f32 %v20, %v47
    %v54 = vmul.f32 %v51, %v50
    %v55 = vmul.f32 %v52, %v50
    %v56 = vmul.f32 %v53, %v50
    %v57 = vld [vmem:[%s0] sm:$0xff]
    %v58 = vld [vmem:[%s0 + $0x8] sm:$0xff]
    %v59 = vld [vmem:[%s0 + $0x10] sm:$0xff]
    %v60 = vld [vmem:[%s2] sm:$0xff]
    %v61 = vld [vmem:[%s2 + $0x8] sm:$0xff]
    %vm62 = vcmask 130048
    %v64 = vsel %vm62, %v57, 0
    %v67 = vsel %vm62, %v58, 0
    %v70 = vsel %vm62, %v59, 0
    %72 = vmatprep.subr.mxu0 0.0
    %73 = vmatpush1.msra.mxu0 0.0
    %74 = vmatprep.subr.mxu0 0.0
    %75 = vmatpush1.msra.mxu0 0.0
    %76 = vmatprep.subr.mxu0 0.0
    %77 = vmatpush1.msra.mxu0 0.0
    %78 = vmatprep.subr.mxu0 0.0
    %79 = vmatpush1.msra.mxu0 0.0
    %80 = vmatprep.subr.mxu0 0.0
    %81 = vmatpush1.msra.mxu0 0.0
    %82 = vmatprep.subr.mxu0 0.0
    %83 = vmatpush1.msra.mxu0 0.0
    %84 = vmatprep.subr.mxu0 0.0
    %85 = vmatpush1.msra.mxu0 0.0
    %86 = vmatprep.subr.mxu0 0.0
    %87 = vmatpush1.msra.mxu0 0.0
    %88 = vmatprep.subr.mxu0 0.0
    %89 = vmatpush1.msra.mxu0 0.0
    %90 = vmatprep.subr.mxu0 0.0
    %91 = vmatpush1.msra.mxu0 0.0
    %92 = vmatprep.subr.mxu0 0.0
    %93 = vmatpush1.msra.mxu0 0.0
    %94 = vmatprep.subr.mxu0 0.0
    %95 = vmatpush1.msra.mxu0 0.0
    %96 = vmatprep.subr.mxu0 0.0
    %97 = vmatpush1.msra.mxu0 0.0
    %98 = vmatprep.subr.mxu0 0.0
    %99 = vmatpush1.msra.mxu0 0.0
    %100 = vmatprep.subr.mxu0 0.0
    %101 = vmatpush1.msra.mxu0 %v61
    %102 = vmatprep.subr.mxu0 0.0
    %103 = vmatpush1.msra.mxu0 %v60
    %104 = vmatprep.subr.mxu0 0.0
    %105 = vmatpush2.msra.mxu0 0.0
    %106 = vmatprep.subr.mxu0 0.0
    %107 = vmatpush2.msra.mxu0 0.0
    %108 = vmatprep.subr.mxu0 0.0
    %109 = vmatpush2.msra.mxu0 0.0
    %110 = vmatprep.subr.mxu0 0.0
    %111 = vmatpush2.msra.mxu0 0.0
    %112 = vmatprep.subr.mxu0 0.0
    %113 = vmatpush2.msra.mxu0 0.0
    %114 = vmatprep.subr.mxu0 0.0
    %115 = vmatpush2.msra.mxu0 0.0
    %116 = vmatprep.subr.mxu0 0.0
    %117 = vmatpush2.msra.mxu0 0.0
    %118 = vmatprep.subr.mxu0 0.0
    %119 = vmatpush2.msra.mxu0 0.0
    %120 = vmatprep.subr.mxu0 0.0
    %121 = vmatpush2.msra.mxu0 0.0
    %122 = vmatprep.subr.mxu0 0.0
    %123 = vmatpush2.msra.mxu0 0.0
    %124 = vmatprep.subr.mxu0 0.0
    %125 = vmatpush2.msra.mxu0 0.0
    %126 = vmatprep.subr.mxu0 0.0
    %127 = vmatpush2.msra.mxu0 0.0
    %128 = vmatprep.subr.mxu0 0.0
    %129 = vmatpush2.msra.mxu0 0.0
    %130 = vmatprep.subr.mxu0 0.0
    %131 = vmatpush2.msra.mxu0 0.0
    %132 = vmatprep.subr.mxu0 0.0
    %133 = vmatpush2.msra.mxu0 0.0
    %134 = vmatprep.subr.mxu0 0.0
    %135 = vmatpush2.msra.mxu0 0.0
    %136 = vmatprep.mubr.f32.mxu0 0.0
    %137 = vmatmul.mubr.f32.gmra.mxu0 %v64
    %v138 = vpop.f32.mrf.mxu0
    %v139 = vadd.f32 0.0, %v138
    %v140 = vpop.f32.mrf.mxu0
    %141 = vmatprep.mubr.f32.mxu0 0.0
    %142 = vmatmul.mubr.f32.gmra.mxu0 %v67
    %v143 = vpop.f32.mrf.mxu0
    %v144 = vadd.f32 0.0, %v143
    %v145 = vpop.f32.mrf.mxu0
    %146 = vmatprep.mubr.f32.mxu0 0.0
    %147 = vmatmul.mubr.f32.gmra.mxu0 %v70
    %v148 = vpop.f32.mrf.mxu0
    %v149 = vadd.f32 0.0, %v148
    %v150 = vpop.f32.mrf.mxu0
    %151 = vdwg.mxu0
    %152 = vxpose.xlu0.b32.start [1/16] %v54, 128
    %153 = vxpose.xlu0.b32.cont [2/16] %v55, 128
    %154 = vxpose.xlu0.b32.cont [3/16] %v56, 128
    %155 = vxpose.xlu0.b32.cont [4/16] 0.0, 128
    %156 = vxpose.xlu0.b32.cont [5/16] 0.0, 128
    %157 = vxpose.xlu0.b32.cont [6/16] 0.0, 128
    %158 = vxpose.xlu0.b32.cont [7/16] 0.0, 128
    %159 = vxpose.xlu0.b32.cont [8/16] 0.0, 128
    %160 = vxpose.xlu0.b32.cont [9/16] 0.0, 128
    %161 = vxpose.xlu0.b32.cont [10/16] 0.0, 128
    %162 = vxpose.xlu0.b32.cont [11/16] 0.0, 128
    %163 = vxpose.xlu0.b32.cont [12/16] 0.0, 128
    %164 = vxpose.xlu0.b32.cont [13/16] 0.0, 128
    %165 = vxpose.xlu0.b32.cont [14/16] 0.0, 128
    %166 = vxpose.xlu0.b32.cont [15/16] 0.0, 128
    %167 = vxpose.xlu0.b32.end [16/16] 0.0, 128
    %v168 = vpop.trf.xlu0
    %v169 = vpop.trf.xlu0
    %v170 = vpop.trf.xlu0
    %v171 = vpop.trf.xlu0
    %v172 = vpop.trf.xlu0
    %v173 = vpop.trf.xlu0
    %v174 = vpop.trf.xlu0
    %v175 = vpop.trf.xlu0
    %v176 = vpop.trf.xlu0
    %v177 = vpop.trf.xlu0
    %v178 = vpop.trf.xlu0
    %v179 = vpop.trf.xlu0
    %v180 = vpop.trf.xlu0
    %v181 = vpop.trf.xlu0
    %v182 = vpop.trf.xlu0
    %v183 = vpop.trf.xlu0
    %187 = vrot.lane.b32.xlu0 %v139, 96
    %v188 = vpop.permute.xlu0 %187
    %189 = vrot.lane.b32.xlu0 %v144, 96
    %v190 = vpop.permute.xlu0 %189
    %191 = vrot.lane.b32.xlu0 %v149, 96
    %v192 = vpop.permute.xlu0 %191
    %v197 = vsel %vm21, %v168, 0
    %v200 = vsel %vm21, %v169, 0
    %v203 = vsel %vm21, %v170, 0
    %205 = vmatprep.subr.mxu0 0.0
    %206 = vmatpush1.msra.mxu0 0.0
    %207 = vmatprep.subr.mxu0 0.0
    %208 = vmatpush1.msra.mxu0 0.0
    %209 = vmatprep.subr.mxu0 0.0
    %210 = vmatpush1.msra.mxu0 0.0
    %211 = vmatprep.subr.mxu0 0.0
    %212 = vmatpush1.msra.mxu0 0.0
    %213 = vmatprep.subr.mxu0 0.0
    %214 = vmatpush1.msra.mxu0 0.0
    %215 = vmatprep.subr.mxu0 0.0
    %216 = vmatpush1.msra.mxu0 0.0
    %217 = vmatprep.subr.mxu0 0.0
    %218 = vmatpush1.msra.mxu0 0.0
    %219 = vmatprep.subr.mxu0 0.0
    %220 = vmatpush1.msra.mxu0 0.0
    %221 = vmatprep.subr.mxu0 0.0
    %222 = vmatpush1.msra.mxu0 0.0
    %223 = vmatprep.subr.mxu0 0.0
    %224 = vmatpush1.msra.mxu0 0.0
    %225 = vmatprep.subr.mxu0 0.0
    %226 = vmatpush1.msra.mxu0 0.0
    %227 = vmatprep.subr.mxu0 0.0
    %228 = vmatpush1.msra.mxu0 0.0
    %229 = vmatprep.subr.mxu0 0.0
    %230 = vmatpush1.msra.mxu0 0.0
    %231 = vmatprep.subr.mxu0 0.0
    %232 = vmatpush1.msra.mxu0 %v192
    %233 = vmatprep.subr.mxu0 0.0
    %234 = vmatpush1.msra.mxu0 %v190
    %235 = vmatprep.subr.mxu0 0.0
    %236 = vmatpush1.msra.mxu0 %v188
    %237 = vmatprep.subr.mxu0 0.0
    %238 = vmatpush2.msra.mxu0 0.0
    %239 = vmatprep.subr.mxu0 0.0
    %240 = vmatpush2.msra.mxu0 0.0
    %241 = vmatprep.subr.mxu0 0.0
    %242 = vmatpush2.msra.mxu0 0.0
    %243 = vmatprep.subr.mxu0 0.0
    %244 = vmatpush2.msra.mxu0 0.0
    %245 = vmatprep.subr.mxu0 0.0
    %246 = vmatpush2.msra.mxu0 0.0
    %247 = vmatprep.subr.mxu0 0.0
    %248 = vmatpush2.msra.mxu0 0.0
    %249 = vmatprep.subr.mxu0 0.0
    %250 = vmatpush2.msra.mxu0 0.0
    %251 = vmatprep.subr.mxu0 0.0
    %252 = vmatpush2.msra.mxu0 0.0
    %253 = vmatprep.subr.mxu0 0.0
    %254 = vmatpush2.msra.mxu0 0.0
    %255 = vmatprep.subr.mxu0 0.0
    %256 = vmatpush2.msra.mxu0 0.0
    %257 = vmatprep.subr.mxu0 0.0
    %258 = vmatpush2.msra.mxu0 0.0
    %259 = vmatprep.subr.mxu0 0.0
    %260 = vmatpush2.msra.mxu0 0.0
    %261 = vmatprep.subr.mxu0 0.0
    %262 = vmatpush2.msra.mxu0 0.0
    %263 = vmatprep.subr.mxu0 0.0
    %264 = vmatpush2.msra.mxu0 0.0
    %265 = vmatprep.subr.mxu0 0.0
    %266 = vmatpush2.msra.mxu0 0.0
    %267 = vmatprep.subr.mxu0 0.0
    %268 = vmatpush2.msra.mxu0 0.0
    %269 = vmatprep.mubr.f32.mxu0 0.0
    %270 = vmatmul.mubr.f32.gmra.mxu0 %v197
    %v271 = vpop.f32.mrf.mxu0
    %v272 = vadd.f32 0.0, %v271
    %v273 = vpop.f32.mrf.mxu0
    %274 = vmatprep.mubr.f32.mxu0 0.0
    %275 = vmatmul.mubr.f32.gmra.mxu0 %v200
    %v276 = vpop.f32.mrf.mxu0
    %v277 = vadd.f32 0.0, %v276
    %v278 = vpop.f32.mrf.mxu0
    %279 = vmatprep.mubr.f32.mxu0 0.0
    %280 = vmatmul.mubr.f32.gmra.mxu0 %v203
    %v281 = vpop.f32.mrf.mxu0
    %v282 = vadd.f32 0.0, %v281
    %v283 = vpop.f32.mrf.mxu0
    %284 = vdwg.mxu0
    %v286 = vsel %vm21, %v54, 0
    %v289 = vsel %vm21, %v55, 0
    %v292 = vsel %vm21, %v56, 0
    %294 = vmatprep.subr.mxu0 0.0
    %295 = vmatpush1.msra.mxu0 0.0
    %296 = vmatprep.subr.mxu0 0.0
    %297 = vmatpush1.msra.mxu0 0.0
    %298 = vmatprep.subr.mxu0 0.0
    %299 = vmatpush1.msra.mxu0 0.0
    %300 = vmatprep.subr.mxu0 0.0
    %301 = vmatpush1.msra.mxu0 0.0
    %302 = vmatprep.subr.mxu0 0.0
    %303 = vmatpush1.msra.mxu0 0.0
    %304 = vmatprep.subr.mxu0 0.0
    %305 = vmatpush1.msra.mxu0 0.0
    %306 = vmatprep.subr.mxu0 0.0
    %307 = vmatpush1.msra.mxu0 0.0
    %308 = vmatprep.subr.mxu0 0.0
    %309 = vmatpush1.msra.mxu0 0.0
    %310 = vmatprep.subr.mxu0 0.0
    %311 = vmatpush1.msra.mxu0 0.0
    %312 = vmatprep.subr.mxu0 0.0
    %313 = vmatpush1.msra.mxu0 0.0
    %314 = vmatprep.subr.mxu0 0.0
    %315 = vmatpush1.msra.mxu0 0.0
    %316 = vmatprep.subr.mxu0 0.0
    %317 = vmatpush1.msra.mxu0 0.0
    %318 = vmatprep.subr.mxu0 0.0
    %319 = vmatpush1.msra.mxu0 0.0
    %320 = vmatprep.subr.mxu0 0.0
    %321 = vmatpush1.msra.mxu0 %v149
    %322 = vmatprep.subr.mxu0 0.0
    %323 = vmatpush1.msra.mxu0 %v144
    %324 = vmatprep.subr.mxu0 0.0
    %325 = vmatpush1.msra.mxu0 %v139
    %326 = vmatprep.subr.mxu0 0.0
    %327 = vmatpush2.msra.mxu0 0.0
    %328 = vmatprep.subr.mxu0 0.0
    %329 = vmatpush2.msra.mxu0 0.0
    %330 = vmatprep.subr.mxu0 0.0
    %331 = vmatpush2.msra.mxu0 0.0
    %332 = vmatprep.subr.mxu0 0.0
    %333 = vmatpush2.msra.mxu0 0.0
    %334 = vmatprep.subr.mxu0 0.0
    %335 = vmatpush2.msra.mxu0 0.0
    %336 = vmatprep.subr.mxu0 0.0
    %337 = vmatpush2.msra.mxu0 0.0
    %338 = vmatprep.subr.mxu0 0.0
    %339 = vmatpush2.msra.mxu0 0.0
    %340 = vmatprep.subr.mxu0 0.0
    %341 = vmatpush2.msra.mxu0 0.0
    %342 = vmatprep.subr.mxu0 0.0
    %343 = vmatpush2.msra.mxu0 0.0
    %344 = vmatprep.subr.mxu0 0.0
    %345 = vmatpush2.msra.mxu0 0.0
    %346 = vmatprep.subr.mxu0 0.0
    %347 = vmatpush2.msra.mxu0 0.0
    %348 = vmatprep.subr.mxu0 0.0
    %349 = vmatpush2.msra.mxu0 0.0
    %350 = vmatprep.subr.mxu0 0.0
    %351 = vmatpush2.msra.mxu0 0.0
    %352 = vmatprep.subr.mxu0 0.0
    %353 = vmatpush2.msra.mxu0 0.0
    %354 = vmatprep.subr.mxu0 0.0
    %355 = vmatpush2.msra.mxu0 0.0
    %356 = vmatprep.subr.mxu0 0.0
    %357 = vmatpush2.msra.mxu0 0.0
    %358 = vmatprep.mubr.f32.mxu0 0.0
    %359 = vmatmul.mubr.f32.gmra.mxu0 %v286
    %v360 = vpop.f32.mrf.mxu0
    %v361 = vadd.f32 %v272, %v360
    %v362 = vpop.f32.mrf.mxu0
    %363 = vmatprep.mubr.f32.mxu0 0.0
    %364 = vmatmul.mubr.f32.gmra.mxu0 %v289
    %v365 = vpop.f32.mrf.mxu0
    %v366 = vadd.f32 %v277, %v365
    %v367 = vpop.f32.mrf.mxu0
    %368 = vmatprep.mubr.f32.mxu0 0.0
    %369 = vmatmul.mubr.f32.gmra.mxu0 %v292
    %v370 = vpop.f32.mrf.mxu0
    %v371 = vadd.f32 %v282, %v370
    %v372 = vpop.f32.mrf.mxu0
    %373 = vdwg.mxu0
    %v374 = vld [vmem:[%s3] sm:$0x1]
    %v376 = vlaneseq
    %v377 = vshrl.u32 %v376, 7
    %v378 = vsub.s32 0, %v377
    %v379 = vrot.slane %v374, %v378
    %v381 = vadd.f32 %v361, %v379
    %v382 = vadd.f32 %v366, %v379
    %v383 = vadd.f32 %v371, %v379
    %vm384 = vcmask 261120
    %385 = vst.msk [vmem:[#allocation2] sm:$0xff] %vm384, %v381
    %386 = vst.msk [vmem:[#allocation2 + $0x8] sm:$0xff] %vm384, %v382
    %387 = vst.msk [vmem:[#allocation2 + $0x10] sm:$0xff] %vm384, %v383
    // Predicated region
    $region18: #{dir_gcn_conv.1} parent=1 // pred_check
      _
    $region19: #{dir_gcn_conv.1} parent=1 // pred_check_branch
      %389 = sbr.rel (0) target = $region21
    $region20: #{dir_gcn_conv.1} parent=1 // pred_region
      %s391 = ssub.s32 384, 384
      %392 = vsyncadd [#allocation3], %s391
      %s393 = sshll.u32 [#allocation2], 4
      %s394 = int_to_ptr.vmem [resolvable:$true] %s393
      %399 = dma.vmem_to_hbm [thread:$0]  %s394, 384, %s4, [#allocation3], 128, 128, 8
    $region21: #{dir_gcn_conv.1} parent=1 // pred_fallthru
      _
    // Predicated region
    $region22: #{dir_gcn_conv.1} parent=1 // pred_check
      _
    $region23: #{dir_gcn_conv.1} parent=1 // pred_check_branch
      %401 = sbr.rel (0) target = $region25
    $region24: #{dir_gcn_conv.1} parent=1 // pred_region
      %402 = dma.done [#allocation3], 384
    $region25: #{dir_gcn_conv.1} parent=1 // pred_fallthru
      _
    %403 = vsyncpa [#allocation3], 1

</llo_original>
